<compile_context>
chip_gen: v5e
topology: v5e:2x2
jax: 0.10.0
libtpu: 0.0.40
codegen_flags: <defaults>
</compile_context>

<pallas_src>
import functools

import jax
import jax.numpy as jnp
from jax.experimental import pallas as pl
from jax.experimental.pallas import tpu as pltpu

LANE = 128                 # vreg lane width
SUBLANE = 8                # f32 sublane count
MAX_BATCH_BLOCK = 512      # max batch rows per grid step
MIN_PARALLEL_ROWS = 128    # don't split across cores below this many rows/core
VMEM_FLOOR = 16 << 20      # never request less scoped VMEM than any default


def _cdiv(a, b):
    return -(-a // b)


def _round_up(v, m):
    return _cdiv(v, m) * m


def _chip_traits():
    """(activation dtype, is_v7x, vmem cap) derived from the local device."""
    try:
        kind = jax.devices()[0].device_kind.lower()
    except Exception:
        kind = ""
    is_v7 = ("v7" in kind) or ("7x" in kind)
    has_bf16_vpu = is_v7 or ("v6" in kind) or ("trillium" in kind)
    act_dtype = jnp.bfloat16 if has_bf16_vpu else jnp.float32  # f32 on v5e
    vmem_cap = (48 << 20) if is_v7 else (100 << 20)
    return act_dtype, is_v7, vmem_cap


def _pick_batch_tiling(batch, two_core):
    """Balanced batch blocks; >=2 grid steps on v7x when there is enough work."""
    n_blocks = _cdiv(batch, MAX_BATCH_BLOCK)
    if two_core and batch >= 2 * MIN_PARALLEL_ROWS:
        n_blocks = max(n_blocks, 2)
    if n_blocks <= 1:
        return batch, 1                      # full-array block, grid of one
    block_b = _round_up(_cdiv(batch, n_blocks), SUBLANE)
    return block_b, _cdiv(batch, block_b)


def _vmem_limit_bytes(block_b, f_in, out_widths, weights, bias_pack, cap):
    param = sum(w.size * w.dtype.itemsize for w in weights)
    param += bias_pack.size * bias_pack.dtype.itemsize
    io = block_b * (f_in + out_widths[-1]) * 4
    acts = 2 * block_b * max(out_widths) * 4
    est = 2 * (param + io) + acts            # double-buffered params/IO + acts
    return int(min(max(4 * est, VMEM_FLOOR), cap))


def _mlp_fused_kernel(*refs, n_layers, out_widths, act_dtype):
    """refs = (x_ref, w_0 .. w_{n-1}, bias_pack_ref, o_ref).

    x_ref: [TB, F_in] f32; w_i: [K_i, N_i] bf16; bias_pack: [n_layers, maxN]
    f32; o_ref: [TB, output_size] f32.  Hidden widths are 128-lane padded and
    padded lanes stay exactly 0 through matmul + zero bias + ReLU, so the last
    layer can consume them with zero weight rows.
    """
    x_ref = refs[0]
    w_refs = refs[1:1 + n_layers]
    b_ref = refs[1 + n_layers]
    o_ref = refs[-1]

    h = x_ref[...]                                           # f32 activations
    for i in range(n_layers):
        w = w_refs[i][...]                                   # bf16 -> MXU
        acc = jnp.dot(h.astype(w.dtype), w,
                      preferred_element_type=jnp.float32)    # f32 accumulate
        bias = b_ref[pl.ds(i, 1), pl.ds(0, out_widths[i])]   # [1, N_i] f32
        acc = acc + bias
        if i + 1 < n_layers:
            h = jnp.maximum(acc, 0.0).astype(act_dtype)      # ReLU epilogue
        else:
            h = acc
    o_ref[...] = h.astype(o_ref.dtype)


def _fused_mlp_forward(x, weights, bias_pack, *, out_widths, act_dtype,
                       two_core, vmem_cap):
    x = x.astype(jnp.float32)
    batch, f_in = x.shape
    n_layers = len(weights)
    block_b, grid_b = _pick_batch_tiling(batch, two_core)
    vmem_limit = _vmem_limit_bytes(block_b, f_in, out_widths, weights,
                                   bias_pack, vmem_cap)

    in_specs = [pl.BlockSpec((block_b, f_in), lambda i: (i, 0))]
    for w in weights:
        # Constant index_map -> weight stays resident in VMEM across the grid.
        # (Add pipeline_mode=pl.Buffered(1) here for very wide hidden layers.)
        in_specs.append(pl.BlockSpec(w.shape, lambda i: (0, 0)))
    in_specs.append(pl.BlockSpec(bias_pack.shape, lambda i: (0, 0)))

    return pl.pallas_call(
        functools.partial(_mlp_fused_kernel, n_layers=n_layers,
                          out_widths=out_widths, act_dtype=act_dtype),
        out_shape=jax.ShapeDtypeStruct((batch, out_widths[-1]), jnp.float32),
        grid=(grid_b,),
        in_specs=in_specs,
        out_specs=pl.BlockSpec((block_b, out_widths[-1]), lambda i: (i, 0)),
        compiler_params=pltpu.CompilerParams(
            dimension_semantics=("parallel",),
            vmem_limit_bytes=vmem_limit),
    )(x, *weights, bias_pack)


class MLPClassifierPallas:
    """Pallas TPU port of the PyTorch MLPClassifier forward:
    Linear -> ReLU -> [Linear -> ReLU]* -> Linear."""

    def __init__(self, input_size, hidden_sizes, output_size, key):
        self.input_size = int(input_size)
        self.hidden_sizes = [int(h) for h in hidden_sizes]
        self.output_size = int(output_size)

        dims = [self.input_size] + self.hidden_sizes + [self.output_size]
        n_layers = len(dims) - 1
        # Layer 0 keeps its true fan_in (no input pad) and the last layer keeps
        # the true output width (no trailing slice); hidden widths are padded
        # to 128 lanes so intermediate activations are lane-dense.
        in_widths = [dims[0]] + [_round_up(d, LANE) for d in dims[1:-1]]
        out_widths = [_round_up(d, LANE) for d in dims[1:-1]] + [dims[-1]]
        max_w = max(out_widths)

        self.raw_params = []          # unpadded f32, for the reference path
        weights = []
        bias_pack = jnp.zeros((n_layers, max_w), jnp.float32)
        for i in range(n_layers):
            fan_in, fan_out = dims[i], dims[i + 1]
            k_in, k_out = in_widths[i], out_widths[i]
            key, kw, kb = jax.random.split(key, 3)
            # PyTorch nn.Linear default init: U(-1/sqrt(fan_in), 1/sqrt(fan_in))
            bound = 1.0 / (fan_in ** 0.5)
            w = jax.random.uniform(kw, (fan_in, fan_out), jnp.float32,
                                   minval=-bound, maxval=bound)
            b = jax.random.uniform(kb, (fan_out,), jnp.float32,
                                   minval=-bound, maxval=bound)
            self.raw_params.append((w, b))

            # One-time pad + bf16 cast; padded rows/cols are exact zeros.
            w_pad = jnp.zeros((k_in, k_out), jnp.bfloat16)
            w_pad = w_pad.at[:fan_in, :fan_out].set(w.astype(jnp.bfloat16))
            weights.append(w_pad)
            bias_pack = bias_pack.at[i, :fan_out].set(b)

        self._weights = tuple(weights)
        self._bias_pack = bias_pack

        act_dtype, is_v7, vmem_cap = _chip_traits()
        self._forward = jax.jit(functools.partial(
            _fused_mlp_forward,
            out_widths=tuple(out_widths),
            act_dtype=act_dtype,
            two_core=is_v7,
            vmem_cap=vmem_cap))

    def __call__(self, x):
        return self._forward(x, self._weights, self._bias_pack)

    def reference_f32(self, x):
        """Pure-JAX f32 reference with exact PyTorch MLPClassifier semantics."""
        h = x.astype(jnp.float32)
        n_layers = len(self.raw_params)
        for idx, (w, b) in enumerate(self.raw_params):
            h = h @ w + b
            if idx != n_layers - 1:
                h = jnp.maximum(h, 0.0)
        return h


if __name__ == "__main__":
    key = jax.random.PRNGKey(0)
    key, k_in = jax.random.split(key)

    batch = 8
    input_size = 32
    hidden_sizes = [64, 32]
    output_size = 16

    model = MLPClassifierPallas(input_size, hidden_sizes, output_size, key)
    x = jax.random.normal(k_in, (batch, input_size), jnp.float32)

    out = jax.block_until_ready(model(x))
    ref = jax.block_until_ready(model.reference_f32(x))

    assert out.shape == (batch, output_size), f"bad shape {out.shape}"
    max_err = jnp.max(jnp.abs(out - ref))
    # bf16 MXU operands vs. true f32 PyTorch semantics: error is O(1e-3) at
    # these widths; tolerance leaves ample margin.
    assert jnp.allclose(out, ref, atol=5e-2, rtol=5e-2), \
        f"max abs err = {max_err}"

    print("KERNEL_OK")
</pallas_src>

<mosaic_0001>
module attributes {stable_mosaic.version = 11 : i64} {
  func.func @_mlp_fused_kernel(%arg0: i32, %arg1: memref<8x32xf32, #tpu.memory_space<vmem>>, %arg2: memref<32x128xbf16, #tpu.memory_space<vmem>>, %arg3: memref<128x128xbf16, #tpu.memory_space<vmem>>, %arg4: memref<128x16xbf16, #tpu.memory_space<vmem>>, %arg5: memref<3x128xf32, #tpu.memory_space<vmem>>, %arg6: memref<8x16xf32, #tpu.memory_space<vmem>>) attributes {dimension_semantics = [#tpu.dimension_semantics<parallel>], iteration_bounds = array<i64: 1>, scalar_prefetch = 0 : i64, scratch_operands = 0 : i64, tpu.core_type = #tpu.core_type<tc>, window_params = [{transform_indices = @transform_0, window_bounds = array<i64: 8, 32>}, {pipeline_mode = #tpu.pipeline_mode<synchronous>, transform_indices = @transform_1, window_bounds = array<i64: 32, 128>}, {pipeline_mode = #tpu.pipeline_mode<synchronous>, transform_indices = @transform_2, window_bounds = array<i64: 128, 128>}, {pipeline_mode = #tpu.pipeline_mode<synchronous>, transform_indices = @transform_3, window_bounds = array<i64: 128, 16>}, {pipeline_mode = #tpu.pipeline_mode<synchronous>, transform_indices = @transform_4, window_bounds = array<i64: 3, 128>}, {transform_indices = @transform_5, window_bounds = array<i64: 8, 16>}]} {
    %c0 = arith.constant 0 : index
    %c0_0 = arith.constant 0 : index
    %0 = vector.load %arg1[%c0, %c0_0] : memref<8x32xf32, #tpu.memory_space<vmem>>, vector<8x32xf32>
    %c0_1 = arith.constant 0 : index
    %c0_2 = arith.constant 0 : index
    %1 = vector.load %arg2[%c0_1, %c0_2] : memref<32x128xbf16, #tpu.memory_space<vmem>>, vector<32x128xbf16>
    %2 = arith.truncf %0 : vector<8x32xf32> to vector<8x32xbf16>
    %cst = arith.constant dense<0.000000e+00> : vector<8x128xf32>
    %3 = tpu.matmul %2, %1, %cst {dimension_numbers = #tpu.dot_dimension_numbers<[1], [0], [0], [1], [0, 0, 1, 1], [], []>} : vector<8x32xbf16>, vector<32x128xbf16>, vector<8x128xf32> -> vector<8x128xf32>
    %c0_3 = arith.constant 0 : index
    %c0_4 = arith.constant 0 : index
    %4 = vector.load %arg5[%c0_3, %c0_4] : memref<3x128xf32, #tpu.memory_space<vmem>>, vector<1x128xf32>
    %5 = vector.broadcast %4 : vector<1x128xf32> to vector<8x128xf32>
    %6 = arith.addf %3, %5 : vector<8x128xf32>
    %cst_5 = arith.constant 0.000000e+00 : f32
    %7 = vector.broadcast %cst_5 : f32 to vector<8x128xf32>
    %8 = arith.maximumf %6, %7 : vector<8x128xf32>
    %c0_6 = arith.constant 0 : index
    %c0_7 = arith.constant 0 : index
    %9 = vector.load %arg3[%c0_6, %c0_7] : memref<128x128xbf16, #tpu.memory_space<vmem>>, vector<128x128xbf16>
    %10 = arith.truncf %8 : vector<8x128xf32> to vector<8x128xbf16>
    %cst_8 = arith.constant dense<0.000000e+00> : vector<8x128xf32>
    %11 = tpu.matmul %10, %9, %cst_8 {dimension_numbers = #tpu.dot_dimension_numbers<[1], [0], [0], [1], [0, 0, 1, 1], [], []>} : vector<8x128xbf16>, vector<128x128xbf16>, vector<8x128xf32> -> vector<8x128xf32>
    %c1 = arith.constant 1 : index
    %c0_9 = arith.constant 0 : index
    %12 = vector.load %arg5[%c1, %c0_9] : memref<3x128xf32, #tpu.memory_space<vmem>>, vector<1x128xf32>
    %13 = vector.broadcast %12 : vector<1x128xf32> to vector<8x128xf32>
    %14 = arith.addf %11, %13 : vector<8x128xf32>
    %cst_10 = arith.constant 0.000000e+00 : f32
    %15 = vector.broadcast %cst_10 : f32 to vector<8x128xf32>
    %16 = arith.maximumf %14, %15 : vector<8x128xf32>
    %c0_11 = arith.constant 0 : index
    %c0_12 = arith.constant 0 : index
    %17 = vector.load %arg4[%c0_11, %c0_12] : memref<128x16xbf16, #tpu.memory_space<vmem>>, vector<128x16xbf16>
    %18 = arith.truncf %16 : vector<8x128xf32> to vector<8x128xbf16>
    %cst_13 = arith.constant dense<0.000000e+00> : vector<8x16xf32>
    %19 = tpu.matmul %18, %17, %cst_13 {dimension_numbers = #tpu.dot_dimension_numbers<[1], [0], [0], [1], [0, 0, 1, 1], [], []>} : vector<8x128xbf16>, vector<128x16xbf16>, vector<8x16xf32> -> vector<8x16xf32>
    %c2 = arith.constant 2 : index
    %c0_14 = arith.constant 0 : index
    %20 = vector.load %arg5[%c2, %c0_14] : memref<3x128xf32, #tpu.memory_space<vmem>>, vector<1x16xf32>
    %21 = vector.broadcast %20 : vector<1x16xf32> to vector<8x16xf32>
    %22 = arith.addf %19, %21 : vector<8x16xf32>
    %c0_15 = arith.constant 0 : index
    %c0_16 = arith.constant 0 : index
    %23 = vector.load %arg6[%c0_15, %c0_16] : memref<8x16xf32, #tpu.memory_space<vmem>>, vector<8x16xf32>
    tpu.vector_store %arg6[%c0_15, %c0_16], %22 {strides = array<i32>} : memref<8x16xf32, #tpu.memory_space<vmem>>, vector<8x16xf32>,
    return
  }
  func.func @transform_0(%arg0: i32) -> (i32, i32) {
    %c0_i32 = arith.constant 0 : i32
    %c0_i32_0 = arith.constant 0 : i32
    return %arg0, %c0_i32 : i32, i32
  }
  func.func @transform_1(%arg0: i32) -> (i32, i32) {
    %c0_i32 = arith.constant 0 : i32
    %c0_i32_0 = arith.constant 0 : i32
    %c0_i32_1 = arith.constant 0 : i32
    return %c0_i32, %c0_i32_0 : i32, i32
  }
  func.func @transform_2(%arg0: i32) -> (i32, i32) {
    %c0_i32 = arith.constant 0 : i32
    %c0_i32_0 = arith.constant 0 : i32
    %c0_i32_1 = arith.constant 0 : i32
    return %c0_i32, %c0_i32_0 : i32, i32
  }
  func.func @transform_3(%arg0: i32) -> (i32, i32) {
    %c0_i32 = arith.constant 0 : i32
    %c0_i32_0 = arith.constant 0 : i32
    %c0_i32_1 = arith.constant 0 : i32
    return %c0_i32, %c0_i32_0 : i32, i32
  }
  func.func @transform_4(%arg0: i32) -> (i32, i32) {
    %c0_i32 = arith.constant 0 : i32
    %c0_i32_0 = arith.constant 0 : i32
    %c0_i32_1 = arith.constant 0 : i32
    return %c0_i32, %c0_i32_0 : i32, i32
  }
  func.func @transform_5(%arg0: i32) -> (i32, i32) {
    %c0_i32 = arith.constant 0 : i32
    %c0_i32_0 = arith.constant 0 : i32
    return %arg0, %c0_i32 : i32, i32
  }
}

</mosaic_0001>

<llo_original>
// kernel: _fused_mlp_forward.1
$region0: #{_fused_mlp_forward.1}
  #allocation0 [shape = 'u32[]', space=smem, size = 0x4, offset = 0x4, fixed_abs, tag = 'smem constant byte address 0x4 - core index']
  #allocation1 [shape = 'u32[72,128]{1,0:T(1,128)}', space=vmem, size = 0x9000, scoped, tag = 'internal scratch']
  %s0 = inlined_call_operand.vmem [shape: f32[8,32], index: 0, kind: input, shape index: {}]
  %s1 = inlined_call_operand.hbm [shape: bf16[32,128], index: 1, kind: input, shape index: {}]
  %s2 = inlined_call_operand.vmem [shape: bf16[128,128], index: 2, kind: input, shape index: {}]
  %s3 = inlined_call_operand.vmem [shape: bf16[128,16], index: 3, kind: input, shape index: {}]
  %s4 = inlined_call_operand.hbm [shape: f32[3,128], index: 4, kind: input, shape index: {}]
  %s5 = inlined_call_operand.hbm [shape: f32[8,16], index: 5, kind: output, shape index: {}]
  %s6 = sld [smem:[#allocation0]]
  $region38: #{_fused_mlp_forward.1} parent=0
    _
  %s8 = ssub.s32 1, %s6
  %s9 = scalar_select 0, %s8, %s6
  $region1: #{_fused_mlp_forward.1} parent=0
    #allocation2 [shape = 'u8[8192]{0}', space=vmem, size = 0x2000, scoped, tag = 'input window, operand 1, single buffered']
    #allocation3 [shape = 's32[1]{0}', space=sflag, size = 0x4, scoped, tag = 'scoped memory for _fused_mlp_forward.1']
    #allocation4 [shape = 's32[1]{0}', space=sflag, size = 0x4, scoped, tag = 'scoped memory for _fused_mlp_forward.1']
    #allocation5 [shape = 'u8[2048]{0}', space=vmem, size = 0x800, scoped, tag = 'input window, operand 4, single buffered']
    #allocation6 [shape = 's32[1]{0}', space=sflag, size = 0x4, scoped, tag = 'scoped memory for _fused_mlp_forward.1']
    #allocation7 [shape = 'u8[4096]{0}', space=vmem, size = 0x1000, scoped, tag = 'output window, operand 0, single buffered']
    %10 = vsyncpa [#allocation3], 0
    %11 = vsyncpa [#allocation6], 0
    %12 = vsyncpa [#allocation4], 0
    // Predicated region
    $region2: #{_fused_mlp_forward.1} parent=1 // pred_check
      _
    $region3: #{_fused_mlp_forward.1} parent=1 // pred_check_branch
      %14 = sbr.rel (0) target = $region5
    $region4: #{_fused_mlp_forward.1} parent=1 // pred_region
      _
    $region5: #{_fused_mlp_forward.1} parent=1 // pred_fallthru
      _
    // Predicated region
    $region6: #{_fused_mlp_forward.1} parent=1 // pred_check
      _
    $region7: #{_fused_mlp_forward.1} parent=1 // pred_check_branch
      %16 = sbr.rel (0) target = $region9
    $region8: #{_fused_mlp_forward.1} parent=1 // pred_region
      %18 = vsyncadd [#allocation3], 0
      %s19 = sshll.u32 %s1, 4
      %s20 = int_to_ptr.hbm [resolvable:$true] %s19
      %s21 = sshll.u32 [#allocation2], 4
      %s22 = int_to_ptr.vmem [resolvable:$true] %s21
      %27 = dma.hbm_to_vmem [thread:$0]  %s20, 256, %s22, [#allocation3], 64, 64, 4
    $region9: #{_fused_mlp_forward.1} parent=1 // pred_fallthru
      _
    // Predicated region
    $region10: #{_fused_mlp_forward.1} parent=1 // pred_check
      _
    $region11: #{_fused_mlp_forward.1} parent=1 // pred_check_branch
      %29 = sbr.rel (0) target = $region13
    $region12: #{_fused_mlp_forward.1} parent=1 // pred_region
      _
    $region13: #{_fused_mlp_forward.1} parent=1 // pred_fallthru
      _
    // Predicated region
    $region14: #{_fused_mlp_forward.1} parent=1 // pred_check
      _
    $region15: #{_fused_mlp_forward.1} parent=1 // pred_check_branch
      %31 = sbr.rel (0) target = $region17
    $region16: #{_fused_mlp_forward.1} parent=1 // pred_region
      _
    $region17: #{_fused_mlp_forward.1} parent=1 // pred_fallthru
      _
    // Predicated region
    $region18: #{_fused_mlp_forward.1} parent=1 // pred_check
      _
    $region19: #{_fused_mlp_forward.1} parent=1 // pred_check_branch
      %33 = sbr.rel (0) target = $region21
    $region20: #{_fused_mlp_forward.1} parent=1 // pred_region
      %35 = vsyncadd [#allocation6], 0
      %s37 = sshll.u32 %s4, 4
      %s38 = int_to_ptr.hbm [resolvable:$true] %s37
      %s39 = sshll.u32 [#allocation5], 4
      %s40 = int_to_ptr.vmem [resolvable:$true] %s39
      %42 = dma.hbm_to_vmem [thread:$0]  %s38, 64, %s40, [#allocation6]
    $region21: #{_fused_mlp_forward.1} parent=1 // pred_fallthru
      _
    // Predicated region
    $region22: #{_fused_mlp_forward.1} parent=1 // pred_check
      _
    $region23: #{_fused_mlp_forward.1} parent=1 // pred_check_branch
      %44 = sbr.rel (0) target = $region25
    $region24: #{_fused_mlp_forward.1} parent=1 // pred_region
      %46 = dma.done [#allocation3], 256
    $region25: #{_fused_mlp_forward.1} parent=1 // pred_fallthru
      _
    // Predicated region
    $region26: #{_fused_mlp_forward.1} parent=1 // pred_check
      _
    $region27: #{_fused_mlp_forward.1} parent=1 // pred_check_branch
      %48 = sbr.rel (0) target = $region29
    $region28: #{_fused_mlp_forward.1} parent=1 // pred_region
      %50 = dma.done [#allocation6], 64
    $region29: #{_fused_mlp_forward.1} parent=1 // pred_fallthru
      _
    %v52 = vld [vmem:[%s0] sm:$0xff]
    %v53 = vld [vmem:[#allocation2] sm:$0xf]
    %v54 = vld [vmem:[#allocation2 + $0x4] sm:$0xf]
    %v55 = vld [vmem:[#allocation2 + $0x8] sm:$0xf]
    %v56 = vld [vmem:[#allocation2 + $0xc] sm:$0xf]
    %v57 = vpack.c.bf16 %v52, %v52
    %v58 = vld [vmem:[#allocation5] sm:$0x1]
    %v59 = vperm.slane %v58, 0
    %v64 = vunpack.c.l.b16 %v53
    %v65 = vunpack.c.l.b16 %v54
    %v66 = vunpack.c.l.b16 %v55
    %v67 = vunpack.c.l.b16 %v56
    %v68 = vpack.c.b16 %v65, %v64
    %v69 = vpack.c.b16 %v67, %v66
    %vm72 = vcmask 261120
    %v74 = vsel %vm72, %v57, 0
    %76 = vmatpush.bf16.msra.mxu0 0
    %77 = vmatpush.bf16.msra.mxu0 0
    %78 = vmatpush.bf16.msra.mxu0 0
    %79 = vmatpush.bf16.msra.mxu0 0
    %80 = vmatpush.bf16.msra.mxu0 0
    %81 = vmatpush.bf16.msra.mxu0 0
    %82 = vmatpush.bf16.msra.mxu0 %v69
    %83 = vmatpush.bf16.msra.mxu0 %v68
    %84 = vmatmul.bf16.gmra.mxu0 %v74
    %v85 = vpop.f32.mrf.mxu0
    %v86 = vadd.f32 %v59, %v85
    %v87 = vpop.f32.mrf.mxu0
    %88 = vdwg.mxu0
    %v89 = vmax.f32 %v86, 0.0
    %v90 = vld [vmem:[%s2] sm:$0xf]
    %v91 = vld [vmem:[%s2 + $0x4] sm:$0xf]
    %v92 = vld [vmem:[%s2 + $0x8] sm:$0xf]
    %v93 = vld [vmem:[%s2 + $0xc] sm:$0xf]
    %v94 = vld [vmem:[%s2 + $0x10] sm:$0xf]
    %v95 = vld [vmem:[%s2 + $0x14] sm:$0xf]
    %v96 = vld [vmem:[%s2 + $0x18] sm:$0xf]
    %v97 = vld [vmem:[%s2 + $0x1c] sm:$0xf]
    %v98 = vld [vmem:[%s2 + $0x20] sm:$0xf]
    %v99 = vld [vmem:[%s2 + $0x24] sm:$0xf]
    %v100 = vld [vmem:[%s2 + $0x28] sm:$0xf]
    %v101 = vld [vmem:[%s2 + $0x2c] sm:$0xf]
    %v102 = vld [vmem:[%s2 + $0x30] sm:$0xf]
    %v103 = vld [vmem:[%s2 + $0x34] sm:$0xf]
    %v104 = vld [vmem:[%s2 + $0x38] sm:$0xf]
    %v105 = vld [vmem:[%s2 + $0x3c] sm:$0xf]
    %v106 = vpack.c.bf16 %v89, %v89
    %v107 = vld [vmem:[#allocation5 + $0x1] sm:$0x1]
    %v108 = vperm.slane %v107, 0
    %v125 = vunpack.c.l.b16 %v90
    %v126 = vunpack.c.l.b16 %v91
    %v127 = vunpack.c.l.b16 %v92
    %v128 = vunpack.c.l.b16 %v93
    %v129 = vunpack.c.l.b16 %v94
    %v130 = vunpack.c.l.b16 %v95
    %v131 = vunpack.c.l.b16 %v96
    %v132 = vunpack.c.l.b16 %v97
    %v133 = vunpack.c.l.b16 %v98
    %v134 = vunpack.c.l.b16 %v99
    %v135 = vunpack.c.l.b16 %v100
    %v136 = vunpack.c.l.b16 %v101
    %v137 = vunpack.c.l.b16 %v102
    %v138 = vunpack.c.l.b16 %v103
    %v139 = vunpack.c.l.b16 %v104
    %v140 = vunpack.c.l.b16 %v105
    %v141 = vpack.c.b16 %v126, %v125
    %v142 = vpack.c.b16 %v128, %v127
    %v143 = vpack.c.b16 %v130, %v129
    %v144 = vpack.c.b16 %v132, %v131
    %v145 = vpack.c.b16 %v134, %v133
    %v146 = vpack.c.b16 %v136, %v135
    %v147 = vpack.c.b16 %v138, %v137
    %v148 = vpack.c.b16 %v140, %v139
    %157 = vmatpush.bf16.msra.mxu0 %v148
    %158 = vmatpush.bf16.msra.mxu0 %v147
    %159 = vmatpush.bf16.msra.mxu0 %v146
    %160 = vmatpush.bf16.msra.mxu0 %v145
    %161 = vmatpush.bf16.msra.mxu0 %v144
    %162 = vmatpush.bf16.msra.mxu0 %v143
    %163 = vmatpush.bf16.msra.mxu0 %v142
    %164 = vmatpush.bf16.msra.mxu0 %v141
    %165 = vmatmul.bf16.gmra.mxu0 %v106
    %v166 = vpop.f32.mrf.mxu0
    %v167 = vadd.f32 %v108, %v166
    %v168 = vpop.f32.mrf.mxu0
    %169 = vdwg.mxu0
    %v170 = vmax.f32 %v167, 0.0
    %v171 = vld [vmem:[%s3] sm:$0xf]
    %v172 = vld [vmem:[%s3 + $0x4] sm:$0xf]
    %v173 = vld [vmem:[%s3 + $0x8] sm:$0xf]
    %v174 = vld [vmem:[%s3 + $0xc] sm:$0xf]
    %v175 = vld [vmem:[%s3 + $0x10] sm:$0xf]
    %v176 = vld [vmem:[%s3 + $0x14] sm:$0xf]
    %v177 = vld [vmem:[%s3 + $0x18] sm:$0xf]
    %v178 = vld [vmem:[%s3 + $0x1c] sm:$0xf]
    %v179 = vld [vmem:[%s3 + $0x20] sm:$0xf]
    %v180 = vld [vmem:[%s3 + $0x24] sm:$0xf]
    %v181 = vld [vmem:[%s3 + $0x28] sm:$0xf]
    %v182 = vld [vmem:[%s3 + $0x2c] sm:$0xf]
    %v183 = vld [vmem:[%s3 + $0x30] sm:$0xf]
    %v184 = vld [vmem:[%s3 + $0x34] sm:$0xf]
    %v185 = vld [vmem:[%s3 + $0x38] sm:$0xf]
    %v186 = vld [vmem:[%s3 + $0x3c] sm:$0xf]
    %v187 = vpack.c.bf16 %v170, %v170
    %v188 = vld [vmem:[#allocation5 + $0x2] sm:$0x1]
    %v189 = vperm.slane %v188, 0
    %v206 = vunpack.c.l.b16 %v171
    %v207 = vunpack.c.l.b16 %v172
    %v208 = vunpack.c.l.b16 %v173
    %v209 = vunpack.c.l.b16 %v174
    %v210 = vunpack.c.l.b16 %v175
    %v211 = vunpack.c.l.b16 %v176
    %v212 = vunpack.c.l.b16 %v177
    %v213 = vunpack.c.l.b16 %v178
    %v214 = vunpack.c.l.b16 %v179
    %v215 = vunpack.c.l.b16 %v180
    %v216 = vunpack.c.l.b16 %v181
    %v217 = vunpack.c.l.b16 %v182
    %v218 = vunpack.c.l.b16 %v183
    %v219 = vunpack.c.l.b16 %v184
    %v220 = vunpack.c.l.b16 %v185
    %v221 = vunpack.c.l.b16 %v186
    %v222 = vpack.c.b16 %v207, %v206
    %v223 = vpack.c.b16 %v209, %v208
    %v224 = vpack.c.b16 %v211, %v210
    %v225 = vpack.c.b16 %v213, %v212
    %v226 = vpack.c.b16 %v215, %v214
    %v227 = vpack.c.b16 %v217, %v216
    %v228 = vpack.c.b16 %v219, %v218
    %v229 = vpack.c.b16 %v221, %v220
    %238 = vmatpush.bf16.msra.mxu0 %v229
    %239 = vmatpush.bf16.msra.mxu0 %v228
    %240 = vmatpush.bf16.msra.mxu0 %v227
    %241 = vmatpush.bf16.msra.mxu0 %v226
    %242 = vmatpush.bf16.msra.mxu0 %v225
    %243 = vmatpush.bf16.msra.mxu0 %v224
    %244 = vmatpush.bf16.msra.mxu0 %v223
    %245 = vmatpush.bf16.msra.mxu0 %v222
    %246 = vmatmul.bf16.gmra.mxu0 %v187
    %v247 = vpop.f32.mrf.mxu0
    %v248 = vadd.f32 %v189, %v247
    %v249 = vpop.f32.mrf.mxu0
    %250 = vdwg.mxu0
    %vm251 = vcmask 130048
    %252 = vst.msk [vmem:[#allocation7] sm:$0xff] %vm251, %v248
    // Predicated region
    $region30: #{_fused_mlp_forward.1} parent=1 // pred_check
      _
    $region31: #{_fused_mlp_forward.1} parent=1 // pred_check_branch
      %254 = sbr.rel (0) target = $region33
    $region32: #{_fused_mlp_forward.1} parent=1 // pred_region
      %256 = vsyncadd [#allocation4], 0
      %s258 = sshll.u32 [#allocation7], 4
      %s259 = int_to_ptr.vmem [resolvable:$true] %s258
      %s260 = sshll.u32 %s5, 4
      %s261 = int_to_ptr.hbm [resolvable:$true] %s260
      %263 = dma.vmem_to_hbm [thread:$0]  %s259, 128, %s261, [#allocation4]
    $region33: #{_fused_mlp_forward.1} parent=1 // pred_fallthru
      _
    // Predicated region
    $region34: #{_fused_mlp_forward.1} parent=1 // pred_check
      _
    $region35: #{_fused_mlp_forward.1} parent=1 // pred_check_branch
      %265 = sbr.rel (0) target = $region37
    $region36: #{_fused_mlp_forward.1} parent=1 // pred_region
      %267 = dma.done [#allocation4], 128
    $region37: #{_fused_mlp_forward.1} parent=1 // pred_fallthru
      _
    %268 = vsyncpa [#allocation3], 1
    %269 = vsyncpa [#allocation6], 1
    %270 = vsyncpa [#allocation4], 1

</llo_original>
